<compile_context>
chip_gen: v5e
topology: v5e:2x2
jax: 0.10.0
libtpu: 0.0.40
codegen_flags: <defaults>
</compile_context>

<pallas_src>
from typing import NamedTuple, Tuple

import jax
import jax.numpy as jnp
from jax.experimental import pallas as pl
from jax.experimental.pallas import tpu as pltpu


_LANE = 128
_SUBLANE = 8
_TN_CAP = 64 * 1024            # max tile width along D (columns)
_SINGLE_STEP_MAX = 32 * 1024   # collapse to one grid step only below this many columns
_MIN_STEPS = 4                 # target parallel steps for large D (v7x: 2 TCs/chip)
_U_BUFS = 3                    # pl.Buffered(3) on the streamed Ut tiles
_OUT_BUFS = 2                  # default output double-buffering
_VMEM_BUDGET = 12 * 1024 * 1024   # tile budget: fits v5e(16)/v6e(32)/v7x(32) MiB scoped defaults
_VMEM_LIMIT = 32 * 1024 * 1024    # explicit scoped limit (<= physical on all three chips)
_FALLBACK_U_BYTES = 256 * 1024    # below this, plain XLA dot beats kernel dispatch overhead


def _round_up(x, m):
    return (x + m - 1) // m * m


def _tile_cap(nc_pad, bs_pad, u_itemsize, out_itemsize):
    """Largest tile width (multiple of 128) whose pipeline buffers fit the VMEM budget."""
    per_col = _U_BUFS * nc_pad * u_itemsize + _OUT_BUFS * bs_pad * out_itemsize
    cap = (_VMEM_BUDGET // per_col) // _LANE * _LANE
    return max(_LANE, min(cap, _TN_CAP))


def _fit_tile(d_pad, tn, cap):
    """Largest multiple-of-128 tile <= min(tn, cap) that divides d_pad."""
    k = max(min(tn, cap) // _LANE, 1)
    while k > 1 and d_pad % (k * _LANE) != 0:
        k -= 1
    return k * _LANE


class SVDBasis(NamedTuple):
    """Pre-transposed / padded / (optionally) low-precision decoder basis."""
    Ut: jax.Array              # (nC, D_pad), lane-dense along D
    D: int
    D_pad: int
    tn: int
    nC: int
    n_channels: int
    grid_size: Tuple[int, int]
    use_pallas: bool


def _svd_decoder_kernel(coeffs_ref, ut_ref, out_ref):
    # coeffs_ref: (bs, nC)   full block, resident across the grid
    # ut_ref:     (nC, tn)   lane-dense streamed tile of U^T (contraction on sublanes)
    # out_ref:    (bs, tn)   lane-dense output tile
    out_ref[...] = jnp.dot(
        coeffs_ref[...], ut_ref[...], preferred_element_type=jnp.float32
    ).astype(out_ref.dtype)


def prepare_svd_basis(U, n_channels, grid_size, *, max_bs=8, u_dtype=None,
                      tn=None, force_pallas=False):
    """One-time preparation of the decoder basis (cache & reuse the result).

    U: (D, nC) with D = n_channels * gx * gy.  The transpose / zero-pad / optional
    low-precision cast all happen here, NOT on the per-decode path.
    `u_dtype=jnp.bfloat16` halves the dominant HBM stream (opt-in; coeffs are cast
    to the same dtype at decode time, accumulation stays f32).
    `max_bs` is a hint for VMEM budgeting; decode re-fits tiles to the actual bs.
    """
    D, nC = U.shape
    gx, gy = grid_size
    assert D == n_channels * gx * gy, "U rows must equal n_channels * gx * gy"

    store_dtype = jnp.dtype(u_dtype) if u_dtype is not None else jnp.dtype(U.dtype)
    Ut = U.T.astype(store_dtype)            # (nC, D): lane-dense along D

    d_lane = _round_up(D, _LANE)
    nc_pad = _round_up(nC, _SUBLANE)
    bs_pad = _round_up(max_bs, _SUBLANE)
    cap = _tile_cap(nc_pad, bs_pad, store_dtype.itemsize, 4)

    if tn is not None:
        assert tn % _LANE == 0, "tn must be a multiple of 128"
        tn_sel = tn
    elif d_lane <= min(cap, _SINGLE_STEP_MAX):
        tn_sel = d_lane                      # single fully-resident step
    else:
        # Large D: keep >= 2 (target 4) parallel steps so v7x's two TensorCores
        # can split the stream, while each step still carries ~1 MiB+ of DMA.
        n_steps = max(pl.cdiv(d_lane, cap),
                      min(_MIN_STEPS, pl.cdiv(d_lane, _SINGLE_STEP_MAX)))
        tn_sel = min(cap, _round_up(pl.cdiv(d_lane, n_steps), _LANE))

    d_pad = _round_up(d_lane, tn_sel)
    if d_pad != D:
        Ut = jnp.pad(Ut, ((0, 0), (0, d_pad - D)))

    use_pallas = bool(force_pallas) or (
        d_pad * nC * store_dtype.itemsize > _FALLBACK_U_BYTES)
    return SVDBasis(Ut=Ut, D=D, D_pad=d_pad, tn=tn_sel, nC=nC,
                    n_channels=n_channels, grid_size=(gx, gy),
                    use_pallas=use_pallas)


def svd_decode_prepared(coeffs, basis):
    """coeffs: (bs, nC) -> (bs, n_channels, gx, gy).  Matches SVD_Decoder.forward."""
    bs, nC = coeffs.shape
    assert nC == basis.nC, "coeffs / basis rank mismatch"
    out_dtype = coeffs.dtype

    # Cast coeffs to the streamed-basis dtype so the MXU takes the native
    # low-precision path when u_dtype=bf16 (accumulation stays f32 in-kernel).
    x = coeffs if coeffs.dtype == basis.Ut.dtype else coeffs.astype(basis.Ut.dtype)

    if not basis.use_pallas:
        # Tiny problem: kernel dispatch + DMA setup dwarfs a few KiB of work; let
        # XLA fuse the small matmul into neighbouring ops instead.
        out_flat = jnp.dot(x, basis.Ut,
                           preferred_element_type=jnp.float32).astype(out_dtype)
    else:
        D_pad = basis.D_pad
        # Re-fit the tile width to the actual batch so pipeline buffers stay
        # inside the VMEM budget even if bs exceeds the prepare-time hint.
        nc_pad = _round_up(nC, _SUBLANE)
        bs_pad = _round_up(bs, _SUBLANE)
        cap = _tile_cap(nc_pad, bs_pad, basis.Ut.dtype.itemsize,
                        jnp.dtype(out_dtype).itemsize)
        tn = _fit_tile(D_pad, basis.tn, cap)
        n_steps = D_pad // tn

        # Deeper pipelining on the streamed basis only pays on multi-step grids.
        ut_spec_kw = {"pipeline_mode": pl.Buffered(_U_BUFS)} if n_steps >= 3 else {}

        cost = pl.CostEstimate(
            flops=2 * bs * D_pad * nC,
            transcendentals=0,
            bytes_accessed=(basis.Ut.size * basis.Ut.dtype.itemsize
                            + x.size * x.dtype.itemsize
                            + bs * D_pad * jnp.dtype(out_dtype).itemsize),
        )

        out_flat = pl.pallas_call(
            _svd_decoder_kernel,
            out_shape=jax.ShapeDtypeStruct((bs, D_pad), out_dtype),
            grid_spec=pltpu.PrefetchScalarGridSpec(
                num_scalar_prefetch=0,
                grid=(n_steps,),
                in_specs=[
                    # coeffs: tiny, same full block for every grid step (resident).
                    pl.BlockSpec((bs, nC), lambda j: (0, 0)),
                    # U^T: (nC, tn) lane-dense tiles streamed along D.
                    pl.BlockSpec((nC, tn), lambda j: (0, j), **ut_spec_kw),
                ],
                out_specs=pl.BlockSpec((bs, tn), lambda j: (0, j)),
            ),
            compiler_params=pltpu.CompilerParams(
                dimension_semantics=("parallel",),
                vmem_limit_bytes=_VMEM_LIMIT,
            ),
            cost_estimate=cost,
        )(x, basis.Ut)

    if basis.D_pad != basis.D:
        # TODO(synk): downstream consumers could keep the lane-padded layout and
        # skip this extra read+write pass over the (bs, D) output.
        out_flat = out_flat[:, :basis.D]

    gx, gy = basis.grid_size
    return out_flat.reshape(bs, basis.n_channels, gx, gy)


def svd_decode(coeffs, U, n_channels, grid_size, **prepare_kwargs):
    """One-shot convenience wrapper.  For repeated decoding (the common case),
    call prepare_svd_basis() once and reuse it with svd_decode_prepared()."""
    basis = prepare_svd_basis(U, n_channels, grid_size,
                              max_bs=coeffs.shape[0], **prepare_kwargs)
    return svd_decode_prepared(coeffs, basis)


if __name__ == "__main__":
    key = jax.random.PRNGKey(0)
    k = jax.random.split(key, 4)

    def reference(U, coeffs, n_channels, gsz):
        R = U @ coeffs.T
        return R.T.reshape(coeffs.shape[0], n_channels, *gsz)

    # --- Case 1: module-native tiny shape -> XLA fallback path. -------------
    bs, nC, n_ch, gsz = 2, 8, 1, (16, 16)
    D = n_ch * gsz[0] * gsz[1]                      # 256
    U = jax.random.normal(k[0], (D, nC), dtype=jnp.float32)
    coeffs = jax.random.normal(k[1], (bs, nC), dtype=jnp.float32)
    ref = reference(U, coeffs, n_ch, gsz)

    basis = prepare_svd_basis(U, n_ch, gsz)
    assert not basis.use_pallas                     # small-problem fallback taken
    out = jax.block_until_ready(svd_decode_prepared(coeffs, basis))
    assert out.shape == (bs, n_ch, *gsz)
    assert jnp.allclose(out, ref, atol=1e-5, rtol=1e-5)

    # --- Case 2: same shape, forced through the Pallas kernel (1 step). -----
    basis_p = prepare_svd_basis(U, n_ch, gsz, force_pallas=True)
    out_p = jax.block_until_ready(svd_decode_prepared(coeffs, basis_p))
    assert jnp.allclose(out_p, ref, atol=1e-5, rtol=1e-5)

    # --- Case 3: batched coeffs + D padding + multi-step (Buffered) grid. ---
    n_ch3, gsz3, bs3 = 3, (16, 20), 16
    D3 = n_ch3 * gsz3[0] * gsz3[1]                  # 960 -> lane/tile-padded to 1024
    U3 = jax.random.normal(k[2], (D3, nC), dtype=jnp.float32)
    coeffs3 = jax.random.normal(k[3], (bs3, nC), dtype=jnp.float32)
    ref3 = reference(U3, coeffs3, n_ch3, gsz3)

    basis3 = prepare_svd_basis(U3, n_ch3, gsz3, max_bs=bs3, tn=256,
                               force_pallas=True)   # 4-step parallel grid
    out3 = jax.block_until_ready(svd_decode_prepared(coeffs3, basis3))
    assert out3.shape == (bs3, n_ch3, *gsz3)
    assert jnp.allclose(out3, ref3, atol=1e-5, rtol=1e-5)

    # --- Case 4: bf16-streamed basis (halved HBM traffic), f32 accumulation. -
    basis_bf16 = prepare_svd_basis(U3, n_ch3, gsz3, max_bs=bs3, tn=256,
                                   force_pallas=True, u_dtype=jnp.bfloat16)
    out4 = jax.block_until_ready(svd_decode_prepared(coeffs3, basis_bf16))
    assert jnp.allclose(out4, ref3, atol=1.5e-1, rtol=2e-2)

    print("KERNEL_OK")
</pallas_src>

<mosaic_0001>
module attributes {stable_mosaic.version = 11 : i64} {
  func.func @_svd_decoder_kernel(%arg0: i32, %arg1: memref<2x8xf32, #tpu.memory_space<vmem>>, %arg2: memref<8x256xf32, #tpu.memory_space<vmem>>, %arg3: memref<2x256xf32, #tpu.memory_space<vmem>>) attributes {dimension_semantics = [#tpu.dimension_semantics<parallel>], iteration_bounds = array<i64: 1>, scalar_prefetch = 0 : i64, scratch_operands = 0 : i64, tpu.core_type = #tpu.core_type<tc>, window_params = [{pipeline_mode = #tpu.pipeline_mode<synchronous>, transform_indices = @transform_0, window_bounds = array<i64: 2, 8>}, {transform_indices = @transform_1, window_bounds = array<i64: 8, 256>}, {transform_indices = @transform_2, window_bounds = array<i64: 2, 256>}]} {
    %c0 = arith.constant 0 : index
    %c0_0 = arith.constant 0 : index
    %0 = vector.load %arg1[%c0, %c0_0] : memref<2x8xf32, #tpu.memory_space<vmem>>, vector<2x8xf32>
    %c0_1 = arith.constant 0 : index
    %c0_2 = arith.constant 0 : index
    %1 = vector.load %arg2[%c0_1, %c0_2] : memref<8x256xf32, #tpu.memory_space<vmem>>, vector<8x256xf32>
    %cst = arith.constant dense<0.000000e+00> : vector<2x256xf32>
    %2 = tpu.matmul %0, %1, %cst {dimension_numbers = #tpu.dot_dimension_numbers<[1], [0], [0], [1], [0, 0, 1, 1], [], []>} : vector<2x8xf32>, vector<8x256xf32>, vector<2x256xf32> -> vector<2x256xf32>
    %c0_3 = arith.constant 0 : index
    %c0_4 = arith.constant 0 : index
    %3 = vector.load %arg3[%c0_3, %c0_4] : memref<2x256xf32, #tpu.memory_space<vmem>>, vector<2x256xf32>
    tpu.vector_store %arg3[%c0_3, %c0_4], %2 {strides = array<i32>} : memref<2x256xf32, #tpu.memory_space<vmem>>, vector<2x256xf32>,
    return
  }
  func.func @transform_0(%arg0: i32) -> (i32, i32) {
    %c0_i32 = arith.constant 0 : i32
    %c0_i32_0 = arith.constant 0 : i32
    %c0_i32_1 = arith.constant 0 : i32
    return %c0_i32, %c0_i32_0 : i32, i32
  }
  func.func @transform_1(%arg0: i32) -> (i32, i32) {
    %c0_i32 = arith.constant 0 : i32
    %c0_i32_0 = arith.constant 0 : i32
    return %c0_i32, %arg0 : i32, i32
  }
  func.func @transform_2(%arg0: i32) -> (i32, i32) {
    %c0_i32 = arith.constant 0 : i32
    %c0_i32_0 = arith.constant 0 : i32
    return %c0_i32, %arg0 : i32, i32
  }
}

</mosaic_0001>

<llo_original>
// kernel: tpu_custom_call.1
$region0: #{tpu_custom_call.1}
  #allocation0 [shape = 'u32[]', space=smem, size = 0x4, offset = 0x4, fixed_abs, tag = 'smem constant byte address 0x4 - core index']
  #allocation1 [shape = 'u32[72,128]{1,0:T(1,128)}', space=vmem, size = 0x9000, scoped, tag = 'internal scratch']
  %s0 = inlined_call_operand.hbm [shape: f32[2,8], index: 0, kind: input, shape index: {}]
  %s1 = inlined_call_operand.hbm [shape: f32[8,256], index: 1, kind: input, shape index: {}]
  %s2 = inlined_call_operand.hbm [shape: f32[2,256], index: 2, kind: output, shape index: {}]
  %s3 = sld [smem:[#allocation0]]
  $region26: #{tpu_custom_call.1} parent=0
    _
  %s5 = ssub.s32 1, %s3
  %s6 = scalar_select 0, %s5, %s3
  $region1: #{tpu_custom_call.1} parent=0
    #allocation2 [shape = 'u8[1024]{0}', space=vmem, size = 0x400, scoped, tag = 'input window, operand 0, single buffered']
    #allocation3 [shape = 's32[1]{0}', space=sflag, size = 0x4, scoped, tag = 'scoped memory for tpu_custom_call.1']
    #allocation4 [shape = 's32[1]{0}', space=sflag, size = 0x4, scoped, tag = 'scoped memory for tpu_custom_call.1']
    #allocation5 [shape = 'u8[8192]{0}', space=vmem, size = 0x2000, scoped, tag = 'input window, operand 1, single buffered']
    #allocation6 [shape = 's32[1]{0}', space=sflag, size = 0x4, scoped, tag = 'scoped memory for tpu_custom_call.1']
    #allocation7 [shape = 'u8[2048]{0}', space=vmem, size = 0x800, scoped, tag = 'output window, operand 0, single buffered']
    %7 = vsyncpa [#allocation3], 0
    %8 = vsyncpa [#allocation6], 0
    %9 = vsyncpa [#allocation4], 0
    // Predicated region
    $region2: #{tpu_custom_call.1} parent=1 // pred_check
      _
    $region3: #{tpu_custom_call.1} parent=1 // pred_check_branch
      %11 = sbr.rel (0) target = $region5
    $region4: #{tpu_custom_call.1} parent=1 // pred_region
      %13 = vsyncadd [#allocation3], 0
      %s15 = sshll.u32 %s0, 4
      %s16 = int_to_ptr.hbm [resolvable:$true] %s15
      %s17 = sshll.u32 [#allocation2], 4
      %s18 = int_to_ptr.vmem [resolvable:$true] %s17
      %20 = dma.hbm_to_vmem [thread:$0]  %s16, 32, %s18, [#allocation3]
    $region5: #{tpu_custom_call.1} parent=1 // pred_fallthru
      _
    // Predicated region
    $region6: #{tpu_custom_call.1} parent=1 // pred_check
      _
    $region7: #{tpu_custom_call.1} parent=1 // pred_check_branch
      %22 = sbr.rel (0) target = $region9
    $region8: #{tpu_custom_call.1} parent=1 // pred_region
      %24 = vsyncadd [#allocation6], 0
      %s26 = sshll.u32 %s1, 4
      %s27 = int_to_ptr.hbm [resolvable:$true] %s26
      %s28 = sshll.u32 [#allocation5], 4
      %s29 = int_to_ptr.vmem [resolvable:$true] %s28
      %31 = dma.hbm_to_vmem [thread:$0]  %s27, 256, %s29, [#allocation6]
    $region9: #{tpu_custom_call.1} parent=1 // pred_fallthru
      _
    // Predicated region
    $region10: #{tpu_custom_call.1} parent=1 // pred_check
      _
    $region11: #{tpu_custom_call.1} parent=1 // pred_check_branch
      %33 = sbr.rel (0) target = $region13
    $region12: #{tpu_custom_call.1} parent=1 // pred_region
      %35 = dma.done [#allocation3], 32
    $region13: #{tpu_custom_call.1} parent=1 // pred_fallthru
      _
    // Predicated region
    $region14: #{tpu_custom_call.1} parent=1 // pred_check
      _
    $region15: #{tpu_custom_call.1} parent=1 // pred_check_branch
      %37 = sbr.rel (0) target = $region17
    $region16: #{tpu_custom_call.1} parent=1 // pred_region
      %39 = dma.done [#allocation6], 256
    $region17: #{tpu_custom_call.1} parent=1 // pred_fallthru
      _
    %v40 = vld [vmem:[#allocation2] sm:$0x3]
    %v41 = vld [vmem:[#allocation5] sm:$0xff]
    %v42 = vld [vmem:[#allocation5 + $0x8] sm:$0xff]
    %vm43 = vcmask 64512
    %v45 = vsel %vm43, %v40, 0
    %47 = vmatpush.msra.mxu0 0.0
    %48 = vmatpush.msra.mxu0 0.0
    %49 = vmatpush.msra.mxu0 0.0
    %50 = vmatpush.msra.mxu0 0.0
    %51 = vmatpush.msra.mxu0 0.0
    %52 = vmatpush.msra.mxu0 0.0
    %53 = vmatpush.msra.mxu0 0.0
    %54 = vmatpush.msra.mxu0 0.0
    %55 = vmatpush.msra.mxu0 0.0
    %56 = vmatpush.msra.mxu0 0.0
    %57 = vmatpush.msra.mxu0 0.0
    %58 = vmatpush.msra.mxu0 0.0
    %59 = vmatpush.msra.mxu0 0.0
    %60 = vmatpush.msra.mxu0 0.0
    %61 = vmatpush.msra.mxu0 0.0
    %62 = vmatpush.msra.mxu0 %v41
    %63 = vmatmul.f32.gmra.mxu0 %v45
    %v64 = vpop.f32.mrf.mxu0
    %v65 = vadd.f32 0.0, %v64
    %66 = vdwg.mxu0
    %67 = vmatpush.msra.mxu0 0.0
    %68 = vmatpush.msra.mxu0 0.0
    %69 = vmatpush.msra.mxu0 0.0
    %70 = vmatpush.msra.mxu0 0.0
    %71 = vmatpush.msra.mxu0 0.0
    %72 = vmatpush.msra.mxu0 0.0
    %73 = vmatpush.msra.mxu0 0.0
    %74 = vmatpush.msra.mxu0 0.0
    %75 = vmatpush.msra.mxu0 0.0
    %76 = vmatpush.msra.mxu0 0.0
    %77 = vmatpush.msra.mxu0 0.0
    %78 = vmatpush.msra.mxu0 0.0
    %79 = vmatpush.msra.mxu0 0.0
    %80 = vmatpush.msra.mxu0 0.0
    %81 = vmatpush.msra.mxu0 0.0
    %82 = vmatpush.msra.mxu0 %v42
    %83 = vmatmul.f32.gmra.mxu0 %v45
    %v84 = vpop.f32.mrf.mxu0
    %v85 = vadd.f32 0.0, %v84
    %86 = vdwg.mxu0
    %v89 = vrot.slane %v85, 6
    %vm90 = vcmask 1041408
    %v91 = vsel %vm90, %v65, %v89
    %93 = vst [vmem:[#allocation7] sm:$0xf] %v91
    // Predicated region
    $region18: #{tpu_custom_call.1} parent=1 // pred_check
      _
    $region19: #{tpu_custom_call.1} parent=1 // pred_check_branch
      %95 = sbr.rel (0) target = $region21
    $region20: #{tpu_custom_call.1} parent=1 // pred_region
      %97 = vsyncadd [#allocation4], 0
      %s99 = sshll.u32 [#allocation7], 4
      %s100 = int_to_ptr.vmem [resolvable:$true] %s99
      %s101 = sshll.u32 %s2, 4
      %s102 = int_to_ptr.hbm [resolvable:$true] %s101
      %104 = dma.vmem_to_hbm [thread:$0]  %s100, 64, %s102, [#allocation4]
    $region21: #{tpu_custom_call.1} parent=1 // pred_fallthru
      _
    // Predicated region
    $region22: #{tpu_custom_call.1} parent=1 // pred_check
      _
    $region23: #{tpu_custom_call.1} parent=1 // pred_check_branch
      %106 = sbr.rel (0) target = $region25
    $region24: #{tpu_custom_call.1} parent=1 // pred_region
      %108 = dma.done [#allocation4], 64
    $region25: #{tpu_custom_call.1} parent=1 // pred_fallthru
      _
    %109 = vsyncpa [#allocation3], 1
    %110 = vsyncpa [#allocation6], 1
    %111 = vsyncpa [#allocation4], 1

</llo_original>
